<compile_context>
chip_gen: v5e
topology: v5e:2x2
jax: 0.10.0
libtpu: 0.0.40
codegen_flags: <defaults>
</compile_context>

<pallas_src>
import math
import functools

import jax
import jax.numpy as jnp
from jax import lax
from jax.experimental import pallas as pl
from jax.experimental.pallas import tpu as pltpu


def _layernorm(x, gamma, beta, eps=1e-5):
    x = x.astype(jnp.float32)
    mu = jnp.mean(x, axis=-1, keepdims=True)
    var = jnp.mean((x - mu) * (x - mu), axis=-1, keepdims=True)
    return (x - mu) * lax.rsqrt(var + eps) * gamma + beta


def _gelu(x, approximate):
    if approximate:
        return jax.nn.gelu(x, approximate=True)     # tanh form -> EUP slot
    # PyTorch F.gelu default = exact (erf-based) gelu, in f32.
    return 0.5 * x * (1.0 + lax.erf(x * (1.0 / math.sqrt(2.0))))


def _vmem_limit_bytes():
    """Generation-aware scoped-VMEM limit: ~3/4 of physical capacity."""
    try:
        info = pltpu.get_tpu_info()
        cap = getattr(info, "vmem_capacity_bytes", None)
        if cap:
            return int(cap) * 3 // 4        # 128 MiB chips -> 96 MiB, v7x -> 48 MiB
    except Exception:
        pass
    return 48 * 1024 * 1024                 # conservative fallback (fits v7x)


def _pick_tile(seq_len, bytes_per_row, budget):
    """Largest tile (multiple of 8, dividing seq_len) whose estimated VMEM
    footprint fits the budget; falls back to the smallest dividing tile."""
    candidates = (1024, 512, 256, 128, 64, 32, 16, 8)
    for cand in candidates:
        if cand <= seq_len and seq_len % cand == 0 and cand * bytes_per_row <= budget:
            return cand
    for cand in reversed(candidates):
        if cand <= seq_len and seq_len % cand == 0:
            return cand
    return seq_len


# ---------------------------------------------------------------------------
# Kernel 1: norm1 + fused K/V projection, one (batch, seq-tile) per grid step.
# ---------------------------------------------------------------------------
def kv_kernel(x_ref, g1_ref, be1_ref, wkv_ref, bkv_ref, k_ref, v_ref,
              *, embed, compute_dtype):
    nx = _layernorm(x_ref[...], g1_ref[0], be1_ref[0])                 # (TS, E) f32
    kv = jnp.dot(nx.astype(compute_dtype), wkv_ref[...],
                 preferred_element_type=jnp.float32) + bkv_ref[0]      # (TS, 2E) f32
    k_ref[...] = kv[:, :embed].astype(k_ref.dtype)
    v_ref[...] = kv[:, embed:].astype(v_ref.dtype)


# ---------------------------------------------------------------------------
# Kernel 2: norm1 + Q proj (scale pre-folded), attention (full-row softmax,
# tile-wise lane-dense prob writes), residual, norm2, FFN, residual.
# Grid = (B, S // TQ), both axes "parallel" (no reduction axis -> megacore/2-TC).
# ---------------------------------------------------------------------------
def attn_ffn_kernel(x_ref, k_ref, v_ref,
                    g1_ref, be1_ref, wq_ref, bq_ref,
                    g2_ref, be2_ref, wf1_ref, bf1_ref, wf2_ref, bf2_ref,
                    out_ref, probs_ref,
                    *, causal, tq, seq_len, compute_dtype, approx_gelu):
    x_tile = x_ref[...].astype(jnp.float32)                            # (TQ, E)

    # norm1 + Q projection for this q-tile (wq/bq pre-scaled by 1/sqrt(E))
    nx1 = _layernorm(x_tile, g1_ref[0], be1_ref[0])
    q = jnp.dot(nx1.astype(compute_dtype), wq_ref[...],
                preferred_element_type=jnp.float32) + bq_ref[0]        # (TQ, E)

    # scores: contract on the last dim of q and k (no K^T materialization)
    scores = lax.dot_general(
        q.astype(compute_dtype), k_ref[...],
        dimension_numbers=(((1,), (1,)), ((), ())),
        preferred_element_type=jnp.float32)                            # (TQ, S)

    if causal:
        q0 = pl.multiple_of(pl.program_id(1) * tq, tq)
        rows = q0 + lax.broadcasted_iota(jnp.int32, (tq, seq_len), 0)
        cols = lax.broadcasted_iota(jnp.int32, (tq, seq_len), 1)
        # reference: torch.where(mask == 0, -1e9, scores)
        scores = jnp.where(cols <= rows, scores, jnp.float32(-1e9))

    m = jnp.max(scores, axis=-1, keepdims=True)
    e = jnp.exp(scores - m)
    denom = jnp.sum(e, axis=-1, keepdims=True)
    inv = 1.0 / denom                         # exact: returned probs sum to 1

    # fold 1/denom onto the (TQ,E) result rather than rescaling the (TQ,S) slab
    attn = jnp.dot(e.astype(compute_dtype), v_ref[...],
                   preferred_element_type=jnp.float32) * inv           # (TQ, E)

    x1 = x_tile + attn                                                 # residual 1

    nx2 = _layernorm(x1, g2_ref[0], be2_ref[0])
    h = jnp.dot(nx2.astype(compute_dtype), wf1_ref[...],
                preferred_element_type=jnp.float32) + bf1_ref[0]
    h = _gelu(h, approx_gelu)
    ff = jnp.dot(h.astype(compute_dtype), wf2_ref[...],
                 preferred_element_type=jnp.float32) + bf2_ref[0]

    out_ref[...] = (x1 + ff).astype(out_ref.dtype)                     # residual 2
    probs_ref[...] = (e * inv).astype(probs_ref.dtype)                 # exact softmax


def transformer_block(x, params, *, mask: bool,
                      tq: int | None = None, ts: int | None = None,
                      compute_dtype=jnp.bfloat16, probs_dtype=jnp.float32,
                      approx_gelu: bool = False):
    """x: (B, S, E) float32; params: dict of weights; mask: python bool (causal).
    Returns (output (B,S,E), attention_scores (B,S,S) post-softmax)."""
    B, S, E = x.shape
    dt = x.dtype
    c_bytes = jnp.dtype(compute_dtype).itemsize
    p_bytes = jnp.dtype(probs_dtype).itemsize

    vmem_limit = _vmem_limit_bytes()
    budget = vmem_limit * 3 // 4            # headroom for compiler scratch/spills

    scale = 1.0 / math.sqrt(E)
    # fold 1/sqrt(E) into the Q projection (one-time weight scale)
    wq = (params["wq"] * scale).astype(compute_dtype)
    bq = params["bq"] * scale
    # fused K/V projection: one (S,E)x(E,2E) matmul keeps the MXU N-dim fuller
    wkv = jnp.concatenate([params["wk"], params["wv"]], axis=1).astype(compute_dtype)
    bkv = jnp.concatenate([params["bk"], params["bv"]], axis=1)
    wf1 = params["wf1"].astype(compute_dtype)
    wf2 = params["wf2"].astype(compute_dtype)

    # ------------------ kernel 1: norm1 + fused K/V projection --------------
    if ts is None:
        w1_resident = 2 * wkv.size * c_bytes                  # double-buffered weight
        per_row1 = (2 * E * 4                                 # x block (2 bufs, f32)
                    + 2 * 2 * E * c_bytes                     # k/v outputs (2 bufs)
                    + 2 * 2 * E * 4)                          # nx/kv live f32 slabs
        ts = _pick_tile(S, per_row1, max(budget - w1_resident, 0))
    assert S % ts == 0
    n_s = S // ts

    x_spec1 = pl.BlockSpec((pl.Squeezed(), ts, E), lambda b, s: (b, s, 0))
    kv_out_spec = pl.BlockSpec((pl.Squeezed(), ts, E), lambda b, s: (b, s, 0))

    def w1_spec(shape):
        return pl.BlockSpec(shape, lambda b, s: (0, 0))

    kv_cost = pl.CostEstimate(
        flops=int(B * (2 * S * E * (2 * E) + 12 * S * E)),
        transcendentals=int(B * S),
        bytes_accessed=int(4 * B * S * E                      # x
                           + 2 * E * 2 * E + 4 * 2 * E        # wkv, bkv
                           + 2 * B * S * E * c_bytes),        # k, v out
    )

    k, v = pl.pallas_call(
        functools.partial(kv_kernel, embed=E, compute_dtype=compute_dtype),
        out_shape=tuple(jax.ShapeDtypeStruct((B, S, E), compute_dtype)
                        for _ in range(2)),
        grid_spec=pltpu.PrefetchScalarGridSpec(
            num_scalar_prefetch=0,
            grid=(B, n_s),
            in_specs=[
                x_spec1,
                w1_spec((1, E)), w1_spec((1, E)),             # norm1 gamma, beta
                w1_spec((E, 2 * E)), w1_spec((1, 2 * E)),     # fused K/V weight, bias
            ],
            out_specs=[kv_out_spec, kv_out_spec],
        ),
        compiler_params=pltpu.CompilerParams(
            dimension_semantics=("parallel", "parallel"),
            vmem_limit_bytes=vmem_limit,
        ),
        cost_estimate=kv_cost,
    )(x, params["g1"], params["be1"], wkv, bkv)

    # ------------------ kernel 2: attention + FFN (query tiled) ------------
    # K/V + weight static residency decides whether to single-buffer the blocks
    # whose index map is constant over the inner grid axis (pl.Buffered(1)).
    kv_block_bytes = 2 * S * E * c_bytes                      # K + V, one copy
    w2_block_bytes = 3 * E * E * c_bytes                      # wq + wf1 + wf2
    economize = 2 * (kv_block_bytes + w2_block_bytes) > (vmem_limit // 2)
    n_buf = 1 if economize else 2

    def const_spec(shape, index_map):
        if economize:
            return pl.BlockSpec(shape, index_map, pipeline_mode=pl.Buffered(1))
        return pl.BlockSpec(shape, index_map)

    if tq is None:
        static = n_buf * (kv_block_bytes + w2_block_bytes)
        per_row2 = (2 * S * p_bytes                           # probs out (2 bufs)
                    + 3 * S * 4                               # scores/e/probs slabs
                    + 10 * E * 4)                             # x/out/q/ffn tiles
        tq = _pick_tile(S, per_row2, max(budget - static, 0))
    assert S % tq == 0
    n_q = S // tq                # (B, n_q) parallel steps -> feeds both TCs on v7x

    x_spec2 = pl.BlockSpec((pl.Squeezed(), tq, E), lambda b, i: (b, i, 0))
    kv_spec = const_spec((pl.Squeezed(), S, E), lambda b, i: (b, 0, 0))
    out_spec = pl.BlockSpec((pl.Squeezed(), tq, E), lambda b, i: (b, i, 0))
    probs_spec = pl.BlockSpec((pl.Squeezed(), tq, S), lambda b, i: (b, i, 0))

    def w2_spec(shape):
        return const_spec(shape, lambda b, i: (0, 0))

    attn_cost = pl.CostEstimate(
        flops=int(B * (4 * S * S * E + 6 * S * E * E + 40 * S * E + 6 * S * S)),
        transcendentals=int(B * (S * S + S * E + 4 * S)),
        bytes_accessed=int(4 * B * S * E                      # x
                           + 2 * B * S * E * c_bytes          # k, v
                           + 4 * B * S * E                    # out
                           + B * S * S * p_bytes              # probs
                           + 3 * E * E * c_bytes + 8 * 4 * E),
    )

    kernel2 = functools.partial(
        attn_ffn_kernel, causal=bool(mask), tq=tq, seq_len=S,
        compute_dtype=compute_dtype, approx_gelu=approx_gelu)

    out, probs = pl.pallas_call(
        kernel2,
        out_shape=(
            jax.ShapeDtypeStruct((B, S, E), dt),
            jax.ShapeDtypeStruct((B, S, S), probs_dtype),
        ),
        grid_spec=pltpu.PrefetchScalarGridSpec(
            num_scalar_prefetch=0,
            grid=(B, n_q),
            in_specs=[
                x_spec2, kv_spec, kv_spec,
                w2_spec((1, E)), w2_spec((1, E)),             # norm1 gamma, beta
                w2_spec((E, E)), w2_spec((1, E)),             # wq (pre-scaled), bq
                w2_spec((1, E)), w2_spec((1, E)),             # norm2 gamma, beta
                w2_spec((E, E)), w2_spec((1, E)),             # ff layer1 W, b
                w2_spec((E, E)), w2_spec((1, E)),             # ff layer2 W, b
            ],
            out_specs=[out_spec, probs_spec],
        ),
        compiler_params=pltpu.CompilerParams(
            dimension_semantics=("parallel", "parallel"),
            vmem_limit_bytes=vmem_limit,
        ),
        cost_estimate=attn_cost,
    )(x, k, v,
      params["g1"], params["be1"], wq, bq,
      params["g2"], params["be2"], wf1, params["bf1"], wf2, params["bf2"])

    return out, probs


def init_params(key, embed_size):
    """Deterministic synthetic params. Linear weights stored as (in, out) so the
    kernels compute y = x @ W + b (equivalent to torch's x @ W.T + b)."""
    ks = jax.random.split(key, 8)
    E = embed_size
    scale = 1.0 / math.sqrt(E)

    def lin(k):
        kw, kb = jax.random.split(k)
        w = jax.random.uniform(kw, (E, E), jnp.float32, -scale, scale)
        b = jax.random.uniform(kb, (1, E), jnp.float32, -scale, scale)
        return w, b

    wq, bq = lin(ks[0])
    wk, bk = lin(ks[1])
    wv, bv = lin(ks[2])
    wf1, bf1 = lin(ks[3])
    wf2, bf2 = lin(ks[4])

    return dict(
        wq=wq, bq=bq, wk=wk, bk=bk, wv=wv, bv=bv,
        g1=jnp.ones((1, E), jnp.float32), be1=jnp.zeros((1, E), jnp.float32),
        g2=jnp.ones((1, E), jnp.float32), be2=jnp.zeros((1, E), jnp.float32),
        wf1=wf1, bf1=bf1, wf2=wf2, bf2=bf2,
    )


if __name__ == "__main__":
    B, S, E = 2, 8, 32
    key = jax.random.PRNGKey(0)
    kx, kp = jax.random.split(key)

    x = jax.random.normal(kx, (B, S, E), jnp.float32)
    params = init_params(kp, E)

    out, scores = transformer_block(x, params, mask=True)
    jax.block_until_ready((out, scores))

    assert out.shape == (B, S, E) and scores.shape == (B, S, S)
    print("KERNEL_OK")
</pallas_src>

<mosaic_0001>
module attributes {stable_mosaic.version = 11 : i64} {
  func.func @kv_kernel(%arg0: i32, %arg1: i32, %arg2: memref<1x8x32xf32, #tpu.memory_space<vmem>>, %arg3: memref<1x32xf32, #tpu.memory_space<vmem>>, %arg4: memref<1x32xf32, #tpu.memory_space<vmem>>, %arg5: memref<32x64xbf16, #tpu.memory_space<vmem>>, %arg6: memref<1x64xf32, #tpu.memory_space<vmem>>, %arg7: memref<1x8x32xbf16, #tpu.memory_space<vmem>>, %arg8: memref<1x8x32xbf16, #tpu.memory_space<vmem>>) attributes {dimension_semantics = [#tpu.dimension_semantics<parallel>, #tpu.dimension_semantics<parallel>], iteration_bounds = array<i64: 2, 1>, scalar_prefetch = 0 : i64, scratch_operands = 0 : i64, tpu.core_type = #tpu.core_type<tc>, window_params = [{transform_indices = @transform_0, window_bounds = array<i64: 1, 8, 32>}, {pipeline_mode = #tpu.pipeline_mode<synchronous>, transform_indices = @transform_1, window_bounds = array<i64: 1, 32>}, {pipeline_mode = #tpu.pipeline_mode<synchronous>, transform_indices = @transform_2, window_bounds = array<i64: 1, 32>}, {pipeline_mode = #tpu.pipeline_mode<synchronous>, transform_indices = @transform_3, window_bounds = array<i64: 32, 64>}, {pipeline_mode = #tpu.pipeline_mode<synchronous>, transform_indices = @transform_4, window_bounds = array<i64: 1, 64>}, {transform_indices = @transform_5, window_bounds = array<i64: 1, 8, 32>}, {transform_indices = @transform_6, window_bounds = array<i64: 1, 8, 32>}]} {
    %c0 = arith.constant 0 : index
    %c0_0 = arith.constant 0 : index
    %c0_1 = arith.constant 0 : index
    %0 = vector.load %arg2[%c0, %c0_0, %c0_1] : memref<1x8x32xf32, #tpu.memory_space<vmem>>, vector<1x8x32xf32>
    %1 = vector.shape_cast %0 : vector<1x8x32xf32> to vector<8x32xf32>
    %c0_2 = arith.constant 0 : index
    %c0_3 = arith.constant 0 : index
    %2 = vector.load %arg3[%c0_2, %c0_3] : memref<1x32xf32, #tpu.memory_space<vmem>>, vector<1x32xf32>
    %3 = vector.shape_cast %2 : vector<1x32xf32> to vector<32xf32>
    %c0_4 = arith.constant 0 : index
    %c0_5 = arith.constant 0 : index
    %4 = vector.load %arg4[%c0_4, %c0_5] : memref<1x32xf32, #tpu.memory_space<vmem>>, vector<1x32xf32>
    %5 = vector.shape_cast %4 : vector<1x32xf32> to vector<32xf32>
    %cst = arith.constant dense<0.000000e+00> : vector<8xf32>
    %6 = vector.multi_reduction <add>, %1, %cst [1] : vector<8x32xf32> to vector<8xf32>
    %7 = vector.shape_cast %6 : vector<8xf32> to vector<8x1xf32>
    %cst_6 = arith.constant 3.200000e+01 : f32
    %8 = vector.broadcast %cst_6 : f32 to vector<8x1xf32>
    %9 = arith.divf %7, %8 : vector<8x1xf32>
    %10 = vector.broadcast %9 : vector<8x1xf32> to vector<8x32xf32>
    %11 = arith.subf %1, %10 : vector<8x32xf32>
    %12 = vector.broadcast %9 : vector<8x1xf32> to vector<8x32xf32>
    %13 = arith.subf %1, %12 : vector<8x32xf32>
    %14 = arith.mulf %11, %13 : vector<8x32xf32>
    %cst_7 = arith.constant dense<0.000000e+00> : vector<8xf32>
    %15 = vector.multi_reduction <add>, %14, %cst_7 [1] : vector<8x32xf32> to vector<8xf32>
    %16 = vector.shape_cast %15 : vector<8xf32> to vector<8x1xf32>
    %cst_8 = arith.constant 3.200000e+01 : f32
    %17 = vector.broadcast %cst_8 : f32 to vector<8x1xf32>
    %18 = arith.divf %16, %17 : vector<8x1xf32>
    %19 = vector.broadcast %9 : vector<8x1xf32> to vector<8x32xf32>
    %20 = arith.subf %1, %19 : vector<8x32xf32>
    %cst_9 = arith.constant 9.99999974E-6 : f32
    %21 = vector.broadcast %cst_9 : f32 to vector<8x1xf32>
    %22 = arith.addf %18, %21 : vector<8x1xf32>
    %23 = math.rsqrt %22 : vector<8x1xf32>
    %24 = vector.broadcast %23 : vector<8x1xf32> to vector<8x32xf32>
    %25 = arith.mulf %20, %24 : vector<8x32xf32>
    %26 = vector.shape_cast %3 : vector<32xf32> to vector<1x32xf32>
    %27 = vector.broadcast %26 : vector<1x32xf32> to vector<8x32xf32>
    %28 = arith.mulf %25, %27 : vector<8x32xf32>
    %29 = vector.shape_cast %5 : vector<32xf32> to vector<1x32xf32>
    %30 = vector.broadcast %29 : vector<1x32xf32> to vector<8x32xf32>
    %31 = arith.addf %28, %30 : vector<8x32xf32>
    %32 = arith.truncf %31 : vector<8x32xf32> to vector<8x32xbf16>
    %c0_10 = arith.constant 0 : index
    %c0_11 = arith.constant 0 : index
    %33 = vector.load %arg5[%c0_10, %c0_11] : memref<32x64xbf16, #tpu.memory_space<vmem>>, vector<32x64xbf16>
    %cst_12 = arith.constant dense<0.000000e+00> : vector<8x64xf32>
    %34 = tpu.matmul %32, %33, %cst_12 {dimension_numbers = #tpu.dot_dimension_numbers<[1], [0], [0], [1], [0, 0, 1, 1], [], []>} : vector<8x32xbf16>, vector<32x64xbf16>, vector<8x64xf32> -> vector<8x64xf32>
    %c0_13 = arith.constant 0 : index
    %c0_14 = arith.constant 0 : index
    %35 = vector.load %arg6[%c0_13, %c0_14] : memref<1x64xf32, #tpu.memory_space<vmem>>, vector<1x64xf32>
    %36 = vector.shape_cast %35 : vector<1x64xf32> to vector<64xf32>
    %37 = vector.shape_cast %36 : vector<64xf32> to vector<1x64xf32>
    %38 = vector.broadcast %37 : vector<1x64xf32> to vector<8x64xf32>
    %39 = arith.addf %34, %38 : vector<8x64xf32>
    %40 = vector.extract_strided_slice %39 {offsets = [0, 0], sizes = [8, 32], strides = [1, 1]} : vector<8x64xf32> to vector<8x32xf32>
    %41 = arith.truncf %40 : vector<8x32xf32> to vector<8x32xbf16>
    %c0_15 = arith.constant 0 : index
    %c0_16 = arith.constant 0 : index
    %c0_17 = arith.constant 0 : index
    %42 = vector.load %arg7[%c0_15, %c0_16, %c0_17] : memref<1x8x32xbf16, #tpu.memory_space<vmem>>, vector<1x8x32xbf16>
    %43 = vector.shape_cast %42 : vector<1x8x32xbf16> to vector<8x32xbf16>
    %44 = vector.shape_cast %41 : vector<8x32xbf16> to vector<1x8x32xbf16>
    tpu.vector_store %arg7[%c0_15, %c0_16, %c0_17], %44 {strides = array<i32>} : memref<1x8x32xbf16, #tpu.memory_space<vmem>>, vector<1x8x32xbf16>,
    %45 = vector.extract_strided_slice %39 {offsets = [0, 32], sizes = [8, 32], strides = [1, 1]} : vector<8x64xf32> to vector<8x32xf32>
    %46 = arith.truncf %45 : vector<8x32xf32> to vector<8x32xbf16>
    %c0_18 = arith.constant 0 : index
    %c0_19 = arith.constant 0 : index
    %c0_20 = arith.constant 0 : index
    %47 = vector.load %arg8[%c0_18, %c0_19, %c0_20] : memref<1x8x32xbf16, #tpu.memory_space<vmem>>, vector<1x8x32xbf16>
    %48 = vector.shape_cast %47 : vector<1x8x32xbf16> to vector<8x32xbf16>
    %49 = vector.shape_cast %46 : vector<8x32xbf16> to vector<1x8x32xbf16>
    tpu.vector_store %arg8[%c0_18, %c0_19, %c0_20], %49 {strides = array<i32>} : memref<1x8x32xbf16, #tpu.memory_space<vmem>>, vector<1x8x32xbf16>,
    return
  }
  func.func @transform_0(%arg0: i32, %arg1: i32) -> (i32, i32, i32) {
    %c0_i32 = arith.constant 0 : i32
    %c0_i32_0 = arith.constant 0 : i32
    return %arg0, %arg1, %c0_i32 : i32, i32, i32
  }
  func.func @transform_1(%arg0: i32, %arg1: i32) -> (i32, i32) {
    %c0_i32 = arith.constant 0 : i32
    %c0_i32_0 = arith.constant 0 : i32
    %c0_i32_1 = arith.constant 0 : i32
    return %c0_i32, %c0_i32_0 : i32, i32
  }
  func.func @transform_2(%arg0: i32, %arg1: i32) -> (i32, i32) {
    %c0_i32 = arith.constant 0 : i32
    %c0_i32_0 = arith.constant 0 : i32
    %c0_i32_1 = arith.constant 0 : i32
    return %c0_i32, %c0_i32_0 : i32, i32
  }
  func.func @transform_3(%arg0: i32, %arg1: i32) -> (i32, i32) {
    %c0_i32 = arith.constant 0 : i32
    %c0_i32_0 = arith.constant 0 : i32
    %c0_i32_1 = arith.constant 0 : i32
    return %c0_i32, %c0_i32_0 : i32, i32
  }
  func.func @transform_4(%arg0: i32, %arg1: i32) -> (i32, i32) {
    %c0_i32 = arith.constant 0 : i32
    %c0_i32_0 = arith.constant 0 : i32
    %c0_i32_1 = arith.constant 0 : i32
    return %c0_i32, %c0_i32_0 : i32, i32
  }
  func.func @transform_5(%arg0: i32, %arg1: i32) -> (i32, i32, i32) {
    %c0_i32 = arith.constant 0 : i32
    %c0_i32_0 = arith.constant 0 : i32
    return %arg0, %arg1, %c0_i32 : i32, i32, i32
  }
  func.func @transform_6(%arg0: i32, %arg1: i32) -> (i32, i32, i32) {
    %c0_i32 = arith.constant 0 : i32
    %c0_i32_0 = arith.constant 0 : i32
    return %arg0, %arg1, %c0_i32 : i32, i32, i32
  }
}

</mosaic_0001>

<llo_original>
// kernel: tpu_custom_call.1
$region0: #{tpu_custom_call.1}
  #allocation0 [shape = 'u32[]', space=smem, size = 0x4, offset = 0x4, fixed_abs, tag = 'smem constant byte address 0x4 - core index']
  #allocation1 [shape = 'u32[72,128]{1,0:T(1,128)}', space=vmem, size = 0x9000, scoped, tag = 'internal scratch']
  %s0 = inlined_call_operand.hbm [shape: f32[2,8,32], index: 0, kind: input, shape index: {}]
  %s1 = inlined_call_operand.hbm [shape: f32[1,32], index: 1, kind: input, shape index: {}]
  %s2 = inlined_call_operand.vmem [shape: f32[1,32], index: 2, kind: input, shape index: {}]
  %s3 = inlined_call_operand.hbm [shape: bf16[32,64], index: 3, kind: input, shape index: {}]
  %s4 = inlined_call_operand.vmem [shape: f32[1,64], index: 4, kind: input, shape index: {}]
  %s5 = inlined_call_operand.hbm [shape: bf16[2,8,32], index: 5, kind: output, shape index: {0}]
  %s6 = inlined_call_operand.hbm [shape: bf16[2,8,32], index: 6, kind: output, shape index: {1}]
  %7 = xla_tuple %s5, %s6
  %s8 = sld [smem:[#allocation0]]
  $region73: #{tpu_custom_call.1} parent=0
    _
  %s10 = ssub.s32 1, %s8
  %s11 = scalar_select 0, %s10, %s8
  $region1: #{tpu_custom_call.1} parent=0
    #allocation2 [shape = 'u8[8192]{0}', space=vmem, size = 0x2000, scoped, tag = 'input window, operand 0']
    #allocation3 [shape = 's32[2]{0}', space=sflag, size = 0x8, scoped, tag = 'scoped memory for tpu_custom_call.1']
    #allocation4 [shape = 's32[2]{0}', space=sflag, size = 0x8, scoped, tag = 'scoped memory for tpu_custom_call.1']
    #allocation5 [shape = 'u8[512]{0}', space=vmem, size = 0x400, scoped, tag = 'input window, operand 1, single buffered']
    #allocation6 [shape = 's32[1]{0}', space=sflag, size = 0x4, scoped, tag = 'scoped memory for tpu_custom_call.1']
    #allocation7 [shape = 'u8[8192]{0}', space=vmem, size = 0x2000, scoped, tag = 'input window, operand 3, single buffered']
    #allocation8 [shape = 'u8[4096]{0}', space=vmem, size = 0x1000, scoped, tag = 'output window, operand 0']
    #allocation9 [shape = 'u8[4096]{0}', space=vmem, size = 0x1000, scoped, tag = 'output window, operand 1']
    #allocation10 [shape = 's32[2]{0}', space=sflag, size = 0x8, scoped, tag = 'scoped memory for tpu_custom_call.1']
    %12 = vsyncpa [#allocation3], 0
    %s13 = scalar_lea.sflag [#allocation3], 1
    %14 = vsyncpa %s13, 0
    %15 = vsyncpa [#allocation6], 0
    %16 = vsyncpa [#allocation4], 0
    %s17 = scalar_lea.sflag [#allocation4], 1
    %18 = vsyncpa %s17, 0
    %19 = vsyncpa [#allocation10], 0
    %s20 = scalar_lea.sflag [#allocation10], 1
    %21 = vsyncpa %s20, 0
    loop: start=0, step=1, limit=4
    $region2: #{tpu_custom_call.1} parent=1 // loop_pre_header
      _
    $region3: #{tpu_custom_call.1} parent=1 // loop_header
      %s23 = sphi 0, %s27
      %p24 = scmp.ge.s32.totalorder %s23, 4
      %s30 = sphi 0, %s42
      %s31 = sphi 0, %s38
      %s32 = sphi 0, %s30
      %s33 = sphi 0, %s31
      %s34 = sphi 0, %s32
      %s35 = sphi 0, %s33
      %s47 = sphi 0, %s49
      %s50 = sphi 0, %s47
      %s51 = sphi 0, %s50
      %s67 = sphi 0, %s51
      %s71 = sphi 0, %s71
      %s73 = sphi 0, %s71
      %s74 = sphi 0, %s73
      %s88 = sphi 0, %s74
      %s92 = sphi 0, %s92
      %s94 = sphi 0, %s92
      %s95 = sphi 0, %s94
      %s109 = sphi 0, %s95
      %s113 = sphi 0, %s113
      %s115 = sphi 0, %s113
      %s116 = sphi 0, %s115
      %s130 = sphi 0, %s116
      %s134 = sphi 0, %s134
      %s136 = sphi 0, %s134
      %s137 = sphi 0, %s136
      %s151 = sphi 0, %s137
      %s159 = sphi 0, %s161
      %s162 = sphi 0, %s159
      %s163 = sphi 0, %s162
      %s179 = sphi 0, %s163
      %s187 = sphi 0, %s189
      %s190 = sphi 0, %s187
      %s191 = sphi 0, %s190
      %s207 = sphi 0, %s191
    $region4: #{tpu_custom_call.1} parent=1 // loop_header_branch
      %26 = sbr.rel (%p24) target = $region8
    $region5: #{tpu_custom_call.1} parent=1 // loop_body
      %s28 = ssub.s32 %s23, 1
      %s29 = ssub.s32 %s23, 2
      %s36 = sadd.s32 1, %s31
      %p37 = scmp.ge.s32.totalorder %s36, 1
      %s38 = scalar_select %p37, 0, %s36
      %s39 = sadd.s32 1, %s30
      %s40 = scalar_select %p37, %s39, %s30
      %p41 = scmp.ge.s32.totalorder %s40, 2
      %s42 = scalar_select %p41, 0, %s40
      %s43 = ssub.s32 %s30, %s42
      %s44 = ssub.s32 %s31, %s38
      %s45 = sor.u32 %s43, %s44
      %p46 = scmp.eq.s32.totalorder %s45, 0
      %s48 = sadd.s32 %s47, 1
      %s49 = scalar_select %p46, %s47, %s48
      %p52 = pneg %p46
      %p53 = scmp.eq.s32.totalorder %s23, 1
      %p54 = por %p52, %p53
      %p55 = scmp.ne.s32.totalorder %s47, %s50
      %p56 = scmp.eq.s32.totalorder %s23, 0
      %p57 = por %p55, %p56
      %p58 = scmp.ne.s32.totalorder %s47, %s50
      %p59 = scmp.eq.s32.totalorder %s28, 1
      %p60 = por %p58, %p59
      %p61 = scmp.ne.s32.totalorder %s50, %s51
      %p62 = scmp.eq.s32.totalorder %s28, 0
      %p63 = por %p61, %p62
      %p64 = scmp.ne.s32.totalorder %s50, %s51
      %p65 = scmp.eq.s32.totalorder %s29, 1
      %p66 = por %p64, %p65
      %p68 = scmp.ne.s32.totalorder %s51, %s67
      %p69 = scmp.eq.s32.totalorder %s29, 0
      %p70 = por %p68, %p69
      %s72 = sadd.s32 %s71, 1
      %p75 = scmp.eq.s32.totalorder %s23, 1
      %p76 = scmp.ne.s32.totalorder %s71, %s73
      %p77 = scmp.eq.s32.totalorder %s23, 0
      %p78 = por %p76, %p77
      %p79 = scmp.ne.s32.totalorder %s71, %s73
      %p80 = scmp.eq.s32.totalorder %s28, 1
      %p81 = por %p79, %p80
      %p82 = scmp.ne.s32.totalorder %s73, %s74
      %p83 = scmp.eq.s32.totalorder %s28, 0
      %p84 = por %p82, %p83
      %p85 = scmp.ne.s32.totalorder %s73, %s74
      %p86 = scmp.eq.s32.totalorder %s29, 1
      %p87 = por %p85, %p86
      %p89 = scmp.ne.s32.totalorder %s74, %s88
      %p90 = scmp.eq.s32.totalorder %s29, 0
      %p91 = por %p89, %p90
      %s93 = sadd.s32 %s92, 1
      %p96 = scmp.eq.s32.totalorder %s23, 1
      %p97 = scmp.ne.s32.totalorder %s92, %s94
      %p98 = scmp.eq.s32.totalorder %s23, 0
      %p99 = por %p97, %p98
      %p100 = scmp.ne.s32.totalorder %s92, %s94
      %p101 = scmp.eq.s32.totalorder %s28, 1
      %p102 = por %p100, %p101
      %p103 = scmp.ne.s32.totalorder %s94, %s95
      %p104 = scmp.eq.s32.totalorder %s28, 0
      %p105 = por %p103, %p104
      %p106 = scmp.ne.s32.totalorder %s94, %s95
      %p107 = scmp.eq.s32.totalorder %s29, 1
      %p108 = por %p106, %p107
      %p110 = scmp.ne.s32.totalorder %s95, %s109
      %p111 = scmp.eq.s32.totalorder %s29, 0
      %p112 = por %p110, %p111
      %s114 = sadd.s32 %s113, 1
      %p117 = scmp.eq.s32.totalorder %s23, 1
      %p118 = scmp.ne.s32.totalorder %s113, %s115
      %p119 = scmp.eq.s32.totalorder %s23, 0
      %p120 = por %p118, %p119
      %p121 = scmp.ne.s32.totalorder %s113, %s115
      %p122 = scmp.eq.s32.totalorder %s28, 1
      %p123 = por %p121, %p122
      %p124 = scmp.ne.s32.totalorder %s115, %s116
      %p125 = scmp.eq.s32.totalorder %s28, 0
      %p126 = por %p124, %p125
      %p127 = scmp.ne.s32.totalorder %s115, %s116
      %p128 = scmp.eq.s32.totalorder %s29, 1
      %p129 = por %p127, %p128
      %p131 = scmp.ne.s32.totalorder %s116, %s130
      %p132 = scmp.eq.s32.totalorder %s29, 0
      %p133 = por %p131, %p132
      %s135 = sadd.s32 %s134, 1
      %p138 = scmp.eq.s32.totalorder %s23, 1
      %p139 = scmp.ne.s32.totalorder %s134, %s136
      %p140 = scmp.eq.s32.totalorder %s23, 0
      %p141 = por %p139, %p140
      %p142 = scmp.ne.s32.totalorder %s134, %s136
      %p143 = scmp.eq.s32.totalorder %s28, 1
      %p144 = por %p142, %p143
      %p145 = scmp.ne.s32.totalorder %s136, %s137
      %p146 = scmp.eq.s32.totalorder %s28, 0
      %p147 = por %p145, %p146
      %p148 = scmp.ne.s32.totalorder %s136, %s137
      %p149 = scmp.eq.s32.totalorder %s29, 1
      %p150 = por %p148, %p149
      %p152 = scmp.ne.s32.totalorder %s137, %s151
      %p153 = scmp.eq.s32.totalorder %s29, 0
      %p154 = por %p152, %p153
      %s155 = ssub.s32 %s30, %s42
      %s156 = ssub.s32 %s31, %s38
      %s157 = sor.u32 %s155, %s156
      %p158 = scmp.eq.s32.totalorder %s157, 0
      %s160 = sadd.s32 %s159, 1
      %s161 = scalar_select %p158, %s159, %s160
      %p164 = pneg %p158
      %p165 = scmp.eq.s32.totalorder %s23, 1
      %p166 = por %p164, %p165
      %p167 = scmp.ne.s32.totalorder %s159, %s162
      %p168 = scmp.eq.s32.totalorder %s23, 0
      %p169 = por %p167, %p168
      %p170 = scmp.ne.s32.totalorder %s159, %s162
      %p171 = scmp.eq.s32.totalorder %s28, 1
      %p172 = por %p170, %p171
      %p173 = scmp.ne.s32.totalorder %s162, %s163
      %p174 = scmp.eq.s32.totalorder %s28, 0
      %p175 = por %p173, %p174
      %p176 = scmp.ne.s32.totalorder %s162, %s163
      %p177 = scmp.eq.s32.totalorder %s29, 1
      %p178 = por %p176, %p177
      %p180 = scmp.ne.s32.totalorder %s163, %s179
      %p181 = scmp.eq.s32.totalorder %s29, 0
      %p182 = por %p180, %p181
      %s183 = ssub.s32 %s30, %s42
      %s184 = ssub.s32 %s31, %s38
      %s185 = sor.u32 %s183, %s184
      %p186 = scmp.eq.s32.totalorder %s185, 0
      %s188 = sadd.s32 %s187, 1
      %s189 = scalar_select %p186, %s187, %s188
      %p192 = pneg %p186
      %p193 = scmp.eq.s32.totalorder %s23, 1
      %p194 = por %p192, %p193
      %p195 = scmp.ne.s32.totalorder %s187, %s190
      %p196 = scmp.eq.s32.totalorder %s23, 0
      %p197 = por %p195, %p196
      %p198 = scmp.ne.s32.totalorder %s187, %s190
      %p199 = scmp.eq.s32.totalorder %s28, 1
      %p200 = por %p198, %p199
      %p201 = scmp.ne.s32.totalorder %s190, %s191
      %p202 = scmp.eq.s32.totalorder %s28, 0
      %p203 = por %p201, %p202
      %p204 = scmp.ne.s32.totalorder %s190, %s191
      %p205 = scmp.eq.s32.totalorder %s29, 1
      %p206 = por %p204, %p205
      %p208 = scmp.ne.s32.totalorder %s191, %s207
      %p209 = scmp.eq.s32.totalorder %s29, 0
      %p210 = por %p208, %p209
      %p211 = scmp.le.s32.totalorder 1, %s23
      %p212 = scmp.lt.s32.totalorder %s23, 3
      %p213 = pnand %p211, %p212
      %p214 = pneg %p213
      // Predicated region
      $region9: #{tpu_custom_call.1} parent=5 // pred_check
        _
      $region10: #{tpu_custom_call.1} parent=5 // pred_check_branch
        %216 = sbr.rel (%p213) target = $region12
      $region11: #{tpu_custom_call.1} parent=5 // pred_region
        %s217 = ssub.s32 %s23, 1
        // Predicated region
        $region13: #{tpu_custom_call.1} parent=11 // pred_check
          %p218 = pneg %p84
        $region14: #{tpu_custom_call.1} parent=11 // pred_check_branch
          %220 = sbr.rel (%p218) target = $region16
        $region15: #{tpu_custom_call.1} parent=11 // pred_region
          %222 = vsyncadd [#allocation6], 0
          %s224 = sshll.u32 %s1, 4
          %s225 = int_to_ptr.hbm [resolvable:$true] %s224
          %s226 = sshll.u32 [#allocation5], 4
          %s227 = int_to_ptr.vmem [resolvable:$true] %s226
          %229 = dma.hbm_to_vmem [thread:$0]  %s225, 16, %s227, [#allocation6]
        $region16: #{tpu_custom_call.1} parent=11 // pred_fallthru
          _
        // Predicated region
        $region17: #{tpu_custom_call.1} parent=11 // pred_check
          %p230 = pneg %p105
        $region18: #{tpu_custom_call.1} parent=11 // pred_check_branch
          %232 = sbr.rel (%p230) target = $region20
        $region19: #{tpu_custom_call.1} parent=11 // pred_region
          _
        $region20: #{tpu_custom_call.1} parent=11 // pred_fallthru
          _
        // Predicated region
        $region21: #{tpu_custom_call.1} parent=11 // pred_check
          %p233 = pneg %p126
        $region22: #{tpu_custom_call.1} parent=11 // pred_check_branch
          %235 = sbr.rel (%p233) target = $region24
        $region23: #{tpu_custom_call.1} parent=11 // pred_region
          %237 = vsyncadd [#allocation6], 0
          %s238 = sshll.u32 %s3, 4
          %s239 = int_to_ptr.hbm [resolvable:$true] %s238
          %s240 = sshll.u32 [#allocation7], 4
          %s241 = int_to_ptr.vmem [resolvable:$true] %s240
          %246 = dma.hbm_to_vmem [thread:$0]  %s239, 256, %s241, [#allocation6], 64, 64, 4
        $region24: #{tpu_custom_call.1} parent=11 // pred_fallthru
          _
        // Predicated region
        $region25: #{tpu_custom_call.1} parent=11 // pred_check
          %p247 = pneg %p147
        $region26: #{tpu_custom_call.1} parent=11 // pred_check_branch
          %249 = sbr.rel (%p247) target = $region28
        $region27: #{tpu_custom_call.1} parent=11 // pred_region
          _
        $region28: #{tpu_custom_call.1} parent=11 // pred_fallthru
          _
      $region12: #{tpu_custom_call.1} parent=5 // pred_fallthru
        _
      %p250 = scmp.lt.s32.totalorder %s23, 2
      // Predicated region
      $region29: #{tpu_custom_call.1} parent=5 // pred_check
        %p251 = pneg %p250
      $region30: #{tpu_custom_call.1} parent=5 // pred_check_branch
        %253 = sbr.rel (%p251) target = $region32
      $region31: #{tpu_custom_call.1} parent=5 // pred_region
        // Predicated region
        $region33: #{tpu_custom_call.1} parent=31 // pred_check
          %p254 = pneg %p57
        $region34: #{tpu_custom_call.1} parent=31 // pred_check_branch
          %256 = sbr.rel (%p254) target = $region36
        $region35: #{tpu_custom_call.1} parent=31 // pred_region
          %s257 = sand.u32 %s47, 1
          %s258 = scalar_lea.sflag [#allocation3], %s257
          %s259 = sand.u32 %s47, 1
          %s260 = smul.addr %s259, 8
          %s261 = scalar_lea.vmem [#allocation2], %s260
          %263 = vsyncadd %s258, 0
          %s264 = sadd.s32 %s31, %s30
          %s265 = smul.addr %s264, 8
          %s266 = scalar_lea.hbm %s0, %s265
          %s268 = sshll.u32 %s266, 4
          %s269 = int_to_ptr.hbm [resolvable:$true] %s268
          %s270 = sshll.u32 %s261, 4
          %s271 = int_to_ptr.vmem [resolvable:$true] %s270
          %273 = dma.hbm_to_vmem [thread:$0]  %s269, 128, %s271, %s258
        $region36: #{tpu_custom_call.1} parent=31 // pred_fallthru
          _
      $region32: #{tpu_custom_call.1} parent=5 // pred_fallthru
        _
      %p274 = scmp.le.s32.totalorder 1, %s23
      %p275 = scmp.lt.s32.totalorder %s23, 3
      %p276 = pnand %p274, %p275
      %p277 = pneg %p276
      // Predicated region
      $region37: #{tpu_custom_call.1} parent=5 // pred_check
        _
      $region38: #{tpu_custom_call.1} parent=5 // pred_check_branch
        %279 = sbr.rel (%p276) target = $region40
      $region39: #{tpu_custom_call.1} parent=5 // pred_region
        %s280 = ssub.s32 %s23, 1
        %s281 = sand.u32 %s50, 1
        %s282 = scalar_lea.sflag [#allocation3], %s281
        %s283 = sand.u32 %s50, 1
        %s284 = smul.addr %s283, 8
        %s285 = scalar_lea.vmem [#allocation2], %s284
        // Predicated region
        $region41: #{tpu_custom_call.1} parent=39 // pred_check
          %p286 = pneg %p63
        $region42: #{tpu_custom_call.1} parent=39 // pred_check_branch
          %288 = sbr.rel (%p286) target = $region44
        $region43: #{tpu_custom_call.1} parent=39 // pred_region
          %290 = dma.done %s282, 128
        $region44: #{tpu_custom_call.1} parent=39 // pred_fallthru
          _
        // Predicated region
        $region45: #{tpu_custom_call.1} parent=39 // pred_check
          %p291 = pneg %p84
        $region46: #{tpu_custom_call.1} parent=39 // pred_check_branch
          %293 = sbr.rel (%p291) target = $region48
        $region47: #{tpu_custom_call.1} parent=39 // pred_region
          %295 = dma.done [#allocation6], 16
        $region48: #{tpu_custom_call.1} parent=39 // pred_fallthru
          _
        // Predicated region
        $region49: #{tpu_custom_call.1} parent=39 // pred_check
          %p296 = pneg %p126
        $region50: #{tpu_custom_call.1} parent=39 // pred_check_branch
          %298 = sbr.rel (%p296) target = $region52
        $region51: #{tpu_custom_call.1} parent=39 // pred_region
          %300 = dma.done [#allocation6], 256
        $region52: #{tpu_custom_call.1} parent=39 // pred_fallthru
          _
        %s301 = sand.u32 %s50, 1
        %s302 = scalar_lea.sflag [#allocation3], %s301
        %s303 = sand.u32 %s50, 1
        %s304 = smul.addr %s303, 8
        %s305 = scalar_lea.vmem [#allocation2], %s304
        %p306 = pneg %p63
        %p307 = pneg %p60
        %p308 = pneg %p84
        %p309 = pneg %p81
        %p310 = pneg %p105
        %p311 = pneg %p102
        %p312 = pneg %p126
        %p313 = pneg %p123
        %p314 = pneg %p147
        %p315 = pneg %p144
        %p316 = pneg %p175
        %p317 = pneg %p172
        %s318 = sand.u32 %s162, 1
        %s319 = scalar_lea.sflag [#allocation4], %s318
        %s320 = sand.u32 %s162, 1
        %s321 = smul.addr %s320, 4
        %s322 = scalar_lea.vmem [#allocation8], %s321
        %p323 = pneg %p203
        %p324 = pneg %p200
        %s325 = sand.u32 %s190, 1
        %s326 = scalar_lea.sflag [#allocation10], %s325
        %s327 = sand.u32 %s190, 1
        %s328 = smul.addr %s327, 4
        %s329 = scalar_lea.vmem [#allocation9], %s328
        %v331 = vld [vmem:[%s285] sm:$0xff]
        %v332 = vld [vmem:[#allocation5] sm:$0x1]
        %v333 = vld [vmem:[%s2] sm:$0x1]
        %vm334 = vcmask 261120
        %v335 = vsel %vm334, %v331, 0.0
        %336 = vadd.xlane.f32.xlu0 %v335
        %v337 = vpop.xlane.xlu0 %336
        %v338 = vrcp.pop 32.0
        %v339 = vmul.f32 32.0, %v338
        %v340 = vsub.f32 1.0, %v339
        %v341 = vmul.f32 %v338, %v340
        %v342 = vadd.f32 %v338, %v341
        %vm343 = vweird.f32 %v338
        %v344 = vsel %vm343, %v338, %v342
        %v345 = vmul.f32 %v337, %v344
        %v346 = vsub.f32 %v331, %v345
        %v347 = vmul.f32 %v346, %v346
        %v348 = vsel %vm334, %v347, 0.0
        %349 = vadd.xlane.f32.xlu0 %v348
        %v350 = vpop.xlane.xlu0 %349
        %v351 = vmul.f32 %v350, %v344
        %v352 = vadd.f32 %v351, 1e-05
        %v353 = vrsqrt.pop %v352
        %v354 = vmul.f32 %v353, %v352
        %v355 = vmul.f32 %v354, %v353
        %v356 = vmul.f32 0.5, %v355
        %v357 = vsub.f32 1.5, %v356
        %v358 = vmul.f32 %v353, %v357
        %vm359 = vweird.f32 %v352
        %vm360 = vweird.f32 %v353
        %vm361 = vmor %vm359, %vm360
        %v362 = vsel %vm361, %v353, %v358
        %v363 = vmul.f32 %v346, %v362
        %v365 = vperm.slane %v332, 0
        %v367 = vmul.f32 %v363, %v365
        %v369 = vperm.slane %v333, 0
        %v371 = vadd.f32 %v367, %v369
        %v372 = vpack.c.bf16 %v371, %v371
        %v373 = vld [vmem:[#allocation7] sm:$0xf]
        %v374 = vld [vmem:[#allocation7 + $0x4] sm:$0xf]
        %v375 = vld [vmem:[#allocation7 + $0x8] sm:$0xf]
        %v376 = vld [vmem:[#allocation7 + $0xc] sm:$0xf]
        %v377 = vld [vmem:[%s4] sm:$0x1]
        %v379 = vperm.slane %v377, 0
        %v385 = vunpack.c.l.b16 %v373
        %v386 = vunpack.c.l.b16 %v374
        %v387 = vunpack.c.l.b16 %v375
        %v388 = vunpack.c.l.b16 %v376
        %v389 = vpack.c.b16 %v386, %v385
        %v390 = vpack.c.b16 %v388, %v387
        %v394 = vsel %vm334, %v372, 0
        %396 = vmatpush.bf16.msra.mxu0 0
        %397 = vmatpush.bf16.msra.mxu0 0
        %398 = vmatpush.bf16.msra.mxu0 0
        %399 = vmatpush.bf16.msra.mxu0 0
        %400 = vmatpush.bf16.msra.mxu0 0
        %401 = vmatpush.bf16.msra.mxu0 0
        %402 = vmatpush.bf16.msra.mxu0 %v390
        %403 = vmatpush.bf16.msra.mxu0 %v389
        %404 = vmatmul.bf16.gmra.mxu0 %v394
        %v405 = vpop.f32.mrf.mxu0
        %v406 = vadd.f32 %v379, %v405
        %v407 = vpop.f32.mrf.mxu0
        %408 = vdwg.mxu0
        %v409 = vpack.c.bf16 %v406, %v406
        %vm410 = vcmask 257024
        %411 = vst.msk [vmem:[%s322] sm:$0xf] %vm410, %v409
        %413 = vrot.lane.b32.xlu0 %v409, 96
        %v414 = vpop.permute.xlu0 %413
        %416 = vst.msk [vmem:[%s329] sm:$0xf] %vm410, %v414
        %s417 = sand.u32 %s162, 1
        %s418 = scalar_lea.sflag [#allocation4], %s417
        %s419 = sand.u32 %s162, 1
        %s420 = smul.addr %s419, 4
        %s421 = scalar_lea.vmem [#allocation8], %s420
        %s422 = sand.u32 %s190, 1
        %s423 = scalar_lea.sflag [#allocation10], %s422
        %s424 = sand.u32 %s190, 1
        %s425 = smul.addr %s424, 4
        %s426 = scalar_lea.vmem [#allocation9], %s425
        // Predicated region
        $region53: #{tpu_custom_call.1} parent=39 // pred_check
          %p427 = pneg %p172
        $region54: #{tpu_custom_call.1} parent=39 // pred_check_branch
          %429 = sbr.rel (%p427) target = $region56
        $region55: #{tpu_custom_call.1} parent=39 // pred_region
          %431 = vsyncadd %s418, 0
          %s432 = sadd.s32 %s33, %s32
          %s433 = smul.addr %s432, 4
          %s434 = scalar_lea.hbm %s5, %s433
          %s436 = sshll.u32 %s421, 4
          %s437 = int_to_ptr.vmem [resolvable:$true] %s436
          %s438 = sshll.u32 %s434, 4
          %s439 = int_to_ptr.hbm [resolvable:$true] %s438
          %441 = dma.vmem_to_hbm [thread:$0]  %s437, 64, %s439, %s418
        $region56: #{tpu_custom_call.1} parent=39 // pred_fallthru
          _
        // Predicated region
        $region57: #{tpu_custom_call.1} parent=39 // pred_check
          %p442 = pneg %p200
        $region58: #{tpu_custom_call.1} parent=39 // pred_check_branch
          %444 = sbr.rel (%p442) target = $region60
        $region59: #{tpu_custom_call.1} parent=39 // pred_region
          %446 = vsyncadd %s423, 0
          %s447 = sadd.s32 %s33, %s32
          %s448 = smul.addr %s447, 4
          %s449 = scalar_lea.hbm %s6, %s448
          %s451 = sshll.u32 %s426, 4
          %s452 = int_to_ptr.vmem [resolvable:$true] %s451
          %s453 = sshll.u32 %s449, 4
          %s454 = int_to_ptr.hbm [resolvable:$true] %s453
          %456 = dma.vmem_to_hbm [thread:$0]  %s452, 64, %s454, %s423
        $region60: #{tpu_custom_call.1} parent=39 // pred_fallthru
          _
      $region40: #{tpu_custom_call.1} parent=5 // pred_fallthru
        _
      %p457 = scmp.le.s32.totalorder 2, %s23
      // Predicated region
      $region61: #{tpu_custom_call.1} parent=5 // pred_check
        %p458 = pneg %p457
      $region62: #{tpu_custom_call.1} parent=5 // pred_check_branch
        %460 = sbr.rel (%p458) target = $region64
      $region63: #{tpu_custom_call.1} parent=5 // pred_region
        %s461 = ssub.s32 %s23, 2
        // Predicated region
        $region65: #{tpu_custom_call.1} parent=63 // pred_check
          %p462 = pneg %p178
        $region66: #{tpu_custom_call.1} parent=63 // pred_check_branch
          %464 = sbr.rel (%p462) target = $region68
        $region67: #{tpu_custom_call.1} parent=63 // pred_region
          %s465 = sand.u32 %s163, 1
          %s466 = scalar_lea.sflag [#allocation4], %s465
          %s467 = sand.u32 %s163, 1
          %s468 = smul.addr %s467, 4
          %s469 = scalar_lea.vmem [#allocation8], %s468
          %471 = dma.done %s466, 64
        $region68: #{tpu_custom_call.1} parent=63 // pred_fallthru
          _
        // Predicated region
        $region69: #{tpu_custom_call.1} parent=63 // pred_check
          %p472 = pneg %p206
        $region70: #{tpu_custom_call.1} parent=63 // pred_check_branch
          %474 = sbr.rel (%p472) target = $region72
        $region71: #{tpu_custom_call.1} parent=63 // pred_region
          %s475 = sand.u32 %s191, 1
          %s476 = scalar_lea.sflag [#allocation10], %s475
          %s477 = sand.u32 %s191, 1
          %s478 = smul.addr %s477, 4
          %s479 = scalar_lea.vmem [#allocation9], %s478
          %481 = dma.done %s476, 64
        $region72: #{tpu_custom_call.1} parent=63 // pred_fallthru
          _
      $region64: #{tpu_custom_call.1} parent=5 // pred_fallthru
        _
    $region6: #{tpu_custom_call.1} parent=1 // loop_footer
      %s27 = sadd.s32 1, %s23
    $region7: #{tpu_custom_call.1} parent=1 // loop_footer_branch
      %22 = sbr.rel target = $region3
    $region8: #{tpu_custom_call.1} parent=1 // loop_exit
      _
    %482 = vsyncpa [#allocation3], 1
    %s483 = scalar_lea.sflag [#allocation3], 1
    %484 = vsyncpa %s483, 1
    %485 = vsyncpa [#allocation6], 1
    %486 = vsyncpa [#allocation4], 1
    %s487 = scalar_lea.sflag [#allocation4], 1
    %488 = vsyncpa %s487, 1
    %489 = vsyncpa [#allocation10], 1
    %s490 = scalar_lea.sflag [#allocation10], 1
    %491 = vsyncpa %s490, 1

</llo_original>
